<compile_context>
chip_gen: v5e
topology: v5e:2x2
jax: 0.10.0
libtpu: 0.0.40
codegen_flags: <defaults>
</compile_context>

<pallas_src>
import functools

import jax
import jax.numpy as jnp
from jax import lax
from jax.experimental import pallas as pl
from jax.experimental.pallas import tpu as pltpu


# ---------------------------------------------------------------------------
# small helpers (static Python, used to size compiler params)
# ---------------------------------------------------------------------------
def _round_up(a, b):
    return -(-a // b) * b


def _tile_bytes(shape, itemsize=4):
    """VMEM footprint of `shape` after (8, 128) sublane/lane padding (f32)."""
    shape = tuple(int(d) for d in shape)
    if len(shape) < 2:
        shape = (1,) * (2 - len(shape)) + shape
    lead = 1
    for d in shape[:-2]:
        lead *= d
    return lead * _round_up(shape[-2], 8) * _round_up(shape[-1], 128) * itemsize


def _vmem_limit(per_step_bytes):
    """Scoped-VMEM request sized from the actual buffers (v7x-safe cap)."""
    return int(max(32 << 20, min(64 << 20, 2 * per_step_bytes + (4 << 20))))


# ---------------------------------------------------------------------------
# kernel A: fused conv/maxpool matmul + per-sample BN partial sums
# ---------------------------------------------------------------------------
def _make_branch_kernel(C_in, L, Kmax, pad_max):
    def kernel(xp_ref, w_ref, z_ref, sum_ref, ssq_ref):
        xp = xp_ref[...]                                       # (C_in, Lp) f32

        # MaxPool1d(kernel=3, stride=1, padding=1) with -inf boundary
        # semantics (the zero padding of xp must not win the max). Computed
        # once per grid step on a (C_in, L) tile (no per-batch unroll).
        xc = xp[:, pad_max:pad_max + L]
        xl = xp[:, pad_max - 1:pad_max - 1 + L]
        xr = xp[:, pad_max + 1:pad_max + 1 + L]
        pos = lax.broadcasted_iota(jnp.int32, (C_in, L), 1)
        neg = jnp.float32(-jnp.inf)
        xl = jnp.where(pos >= 1, xl, neg)
        xr = jnp.where(pos <= L - 2, xr, neg)
        mp = jnp.maximum(xc, jnp.maximum(xl, xr))              # (C_in, L)

        # im2col slab: Kmax shifted windows (tap-major rows) + maxpool rows.
        cols = [xp[:, j:j + L] for j in range(Kmax)]
        cols.append(mp)
        m = jnp.concatenate(cols, axis=0)                      # (Kmax*C_in + C_in, L)

        # Single fused MXU matmul for all four branches (bf16 operands if the
        # fused weight was cast in the wrapper; accumulation stays f32).
        z = jnp.dot(w_ref[...], m.astype(w_ref.dtype),
                    preferred_element_type=jnp.float32)        # (4F, L) f32

        z_ref[...] = z                                         # lane-dense (L) store
        sum_ref[...] = jnp.sum(z, axis=1, keepdims=True)       # (4F, 1)
        ssq_ref[...] = jnp.sum(z * z, axis=1, keepdims=True)   # (4F, 1)

    return kernel


# ---------------------------------------------------------------------------
# kernel B: finalize batch stats, normalize + affine + ReLU (in place over z)
# ---------------------------------------------------------------------------
def _make_bn_relu_kernel(count, eps):
    def kernel(z_ref, sum_ref, ssq_ref, gamma_ref, beta_ref, out_ref):
        inv_cnt = jnp.float32(1.0 / count)
        s = jnp.sum(sum_ref[...], axis=0)                      # (4F, 1)
        ss = jnp.sum(ssq_ref[...], axis=0)                     # (4F, 1)
        mean = s * inv_cnt
        var = jnp.maximum(ss * inv_cnt - mean * mean, 0.0)     # biased variance
        scale = gamma_ref[...] * lax.rsqrt(var + eps)
        shift = beta_ref[...] - mean * scale
        y = z_ref[...] * scale + shift
        out_ref[...] = jnp.maximum(y, 0.0).astype(out_ref.dtype)

    return kernel


# ---------------------------------------------------------------------------
# wrapper-side weight preprocessing (one-time, plain JAX)
# ---------------------------------------------------------------------------
def _build_fused_weight(params, kernel_sizes, C_in, F, Kmax, pad_max):
    """Fused weight (4F, Kmax*C_in + C_in) with the bottleneck folded in."""
    wb = params.get("bottleneck", None)
    if wb is None:                                   # pass_through bottleneck
        wb = jnp.eye(C_in, dtype=jnp.float32)        # (C_in, C_in)
    else:
        wb = wb[:, :, 0].astype(jnp.float32)         # (Cb, C_in)

    blocks = []
    for g, name in enumerate(("conv1", "conv2", "conv3")):
        wg = params[name].astype(jnp.float32)        # (F, Cb, Kg)
        Kg = int(kernel_sizes[g])
        off = pad_max - Kg // 2                      # tap offset in the Kmax frame
        wf = jnp.einsum("fbk,bc->fkc", wg, wb)       # (F, Kg, C_in) bottleneck folded
        wtap = jnp.zeros((F, Kmax, C_in), jnp.float32)
        wtap = wtap.at[:, off:off + Kg, :].set(wf)
        blocks.append(wtap.reshape(F, Kmax * C_in))
    w_branch = jnp.concatenate(blocks, axis=0)                        # (3F, Kmax*C_in)

    w_mp = params["conv_mp"][:, :, 0].astype(jnp.float32)             # (F, C_in)
    top = jnp.concatenate([w_branch, jnp.zeros((3 * F, C_in), jnp.float32)], axis=1)
    bot = jnp.concatenate([jnp.zeros((F, Kmax * C_in), jnp.float32), w_mp], axis=1)
    return jnp.concatenate([top, bot], axis=0)                        # (4F, Kmax*C_in + C_in)


# ---------------------------------------------------------------------------
# forward
# ---------------------------------------------------------------------------
def inception_time_forward(x, params, kernel_sizes=(9, 19, 39), use_bf16=False):
    """x: (N, C_in, L) float32 (PyTorch NCL). Returns (N, 4*n_filters, L) f32."""
    N, C_in, L = x.shape
    F = params["conv1"].shape[0]
    Kmax = int(max(kernel_sizes))
    assert Kmax >= 3 and all(int(k) % 2 == 1 for k in kernel_sizes)
    pad_max = Kmax // 2
    Lp = L + 2 * pad_max
    Ktot = Kmax * C_in + C_in
    C4 = 4 * F
    eps = 1e-5

    # Glue: zero padding along time + one-time fused-weight construction.
    x_pad = jnp.pad(x.astype(jnp.float32),
                    ((0, 0), (0, 0), (pad_max, pad_max)))             # (N, C_in, Lp)
    w_all = _build_fused_weight(params, kernel_sizes, C_in, F, Kmax, pad_max)
    if use_bf16:
        # v6e/v7x: bf16 MXU operands (f32 accumulation); elementwise stays f32.
        w_all = w_all.astype(jnp.bfloat16)
    gamma = params["gamma"].reshape(C4, 1).astype(jnp.float32)
    beta = params["beta"].reshape(C4, 1).astype(jnp.float32)

    # ---- pass 1: fused conv/maxpool matmul + BN partial sums ---------------
    est_a = (2 * _tile_bytes((C_in, Lp)) + _tile_bytes((C4, Ktot))
             + 2 * _tile_bytes((C4, L)) + 4 * _tile_bytes((C4, 1))
             + 2 * _tile_bytes((Ktot, L)))
    z, sums, ssqs = pl.pallas_call(
        _make_branch_kernel(C_in, L, Kmax, pad_max),
        grid=(N,),
        in_specs=[
            pl.BlockSpec((None, C_in, Lp), lambda n: (n, 0, 0)),
            pl.BlockSpec((C4, Ktot), lambda n: (0, 0)),
        ],
        out_specs=(
            pl.BlockSpec((None, C4, L), lambda n: (n, 0, 0)),
            pl.BlockSpec((None, C4, 1), lambda n: (n, 0, 0)),
            pl.BlockSpec((None, C4, 1), lambda n: (n, 0, 0)),
        ),
        out_shape=(
            jax.ShapeDtypeStruct((N, C4, L), jnp.float32),
            jax.ShapeDtypeStruct((N, C4, 1), jnp.float32),
            jax.ShapeDtypeStruct((N, C4, 1), jnp.float32),
        ),
        compiler_params=pltpu.CompilerParams(
            dimension_semantics=("parallel",),
            vmem_limit_bytes=_vmem_limit(est_a)),
        cost_estimate=pl.CostEstimate(
            flops=2 * N * C4 * Ktot * L + 8 * N * C_in * L,
            transcendentals=0,
            bytes_accessed=(x_pad.size * 4
                            + w_all.size * w_all.dtype.itemsize
                            + N * C4 * (L + 2) * 4)),
    )(x_pad, w_all)

    # ---- pass 2: finalize stats, normalize + ReLU, write out in place ------
    est_b = (4 * _tile_bytes((C4, L)) + 2 * _tile_bytes((N, C4, 1))
             + 2 * _tile_bytes((C4, 1)))
    out = pl.pallas_call(
        _make_bn_relu_kernel(N * L, eps),
        grid=(N,),
        in_specs=[
            pl.BlockSpec((None, C4, L), lambda n: (n, 0, 0)),
            pl.BlockSpec((N, C4, 1), lambda n: (0, 0, 0)),
            pl.BlockSpec((N, C4, 1), lambda n: (0, 0, 0)),
            pl.BlockSpec((C4, 1), lambda n: (0, 0)),
            pl.BlockSpec((C4, 1), lambda n: (0, 0)),
        ],
        out_specs=pl.BlockSpec((None, C4, L), lambda n: (n, 0, 0)),
        out_shape=jax.ShapeDtypeStruct((N, C4, L), jnp.float32),
        input_output_aliases={0: 0},          # overwrite z in place
        compiler_params=pltpu.CompilerParams(
            dimension_semantics=("parallel",),
            vmem_limit_bytes=_vmem_limit(est_b)),
        cost_estimate=pl.CostEstimate(
            flops=4 * N * C4 * L,
            transcendentals=N * C4,
            bytes_accessed=2 * N * C4 * L * 4),
    )(z, sums, ssqs, gamma, beta)
    return out                                                        # (N, 4F, L)


# ---------------------------------------------------------------------------
# parameters & pure-JAX reference
# ---------------------------------------------------------------------------
def init_params(key, in_channels, n_filters, kernel_sizes, bottleneck_channels):
    ks = jax.random.split(key, 5)
    s = 0.1
    return {
        "bottleneck": s * jax.random.normal(
            ks[0], (bottleneck_channels, in_channels, 1), jnp.float32),
        "conv1": s * jax.random.normal(
            ks[1], (n_filters, bottleneck_channels, kernel_sizes[0]), jnp.float32),
        "conv2": s * jax.random.normal(
            ks[2], (n_filters, bottleneck_channels, kernel_sizes[1]), jnp.float32),
        "conv3": s * jax.random.normal(
            ks[3], (n_filters, bottleneck_channels, kernel_sizes[2]), jnp.float32),
        "conv_mp": s * jax.random.normal(
            ks[4], (n_filters, in_channels, 1), jnp.float32),
        "gamma": jnp.ones((4 * n_filters,), jnp.float32),   # BatchNorm1d default init
        "beta": jnp.zeros((4 * n_filters,), jnp.float32),
    }


def reference_forward(x, params, kernel_sizes=(9, 19, 39)):
    """Pure-JAX reference mirroring the PyTorch forward (training-mode BN)."""
    def conv1d(inp, w, pad):
        return lax.conv_general_dilated(
            inp, w, window_strides=(1,), padding=[(pad, pad)],
            dimension_numbers=("NCH", "OIH", "NCH"))

    zb = conv1d(x, params["bottleneck"], 0)
    zmp = lax.reduce_window(x, -jnp.inf, lax.max, (1, 1, 3), (1, 1, 1),
                            [(0, 0), (0, 0), (1, 1)])
    z1 = conv1d(zb, params["conv1"], kernel_sizes[0] // 2)
    z2 = conv1d(zb, params["conv2"], kernel_sizes[1] // 2)
    z3 = conv1d(zb, params["conv3"], kernel_sizes[2] // 2)
    z4 = conv1d(zmp, params["conv_mp"], 0)
    z = jnp.concatenate([z1, z2, z3, z4], axis=1)
    mean = jnp.mean(z, axis=(0, 2), keepdims=True)
    var = jnp.mean((z - mean) ** 2, axis=(0, 2), keepdims=True)
    y = (z - mean) / jnp.sqrt(var + 1e-5)
    y = y * params["gamma"].reshape(1, -1, 1) + params["beta"].reshape(1, -1, 1)
    return jnp.maximum(y, 0.0)


# ---------------------------------------------------------------------------
# demo / self-check
# ---------------------------------------------------------------------------
if __name__ == "__main__":
    # Small shapes consistent with the module: batch=2, in_channels=4, seq=16,
    # n_filters=8, bottleneck_channels=32, kernel_sizes=[9, 19, 39].
    N, C_in, L = 2, 4, 16
    n_filters = 8
    bottleneck_channels = 32
    kernel_sizes = (9, 19, 39)

    root = jax.random.PRNGKey(0)
    k_x, k_p = jax.random.split(root)
    x = jax.random.normal(k_x, (N, C_in, L), jnp.float32)
    params = init_params(k_p, C_in, n_filters, kernel_sizes, bottleneck_channels)

    fwd = jax.jit(functools.partial(
        inception_time_forward, kernel_sizes=kernel_sizes, use_bf16=False))
    out = jax.block_until_ready(fwd(x, params))

    ref = jax.block_until_ready(reference_forward(x, params, kernel_sizes))
    assert out.shape == (N, 4 * n_filters, L), out.shape
    assert jnp.allclose(out, ref, atol=2e-3, rtol=2e-3), (
        float(jnp.max(jnp.abs(out - ref))))

    # bf16-MXU path (v6e/v7x feedback item); looser tolerance for bf16 operands.
    fwd_bf16 = jax.jit(functools.partial(
        inception_time_forward, kernel_sizes=kernel_sizes, use_bf16=True))
    out_b = jax.block_until_ready(fwd_bf16(x, params))
    assert jnp.allclose(out_b, ref, atol=1e-1, rtol=1e-1), (
        float(jnp.max(jnp.abs(out_b - ref))))

    print("KERNEL_OK")
</pallas_src>

<mosaic_0001>
module attributes {stable_mosaic.version = 11 : i64} {
  func.func @kernel(%arg0: i32, %arg1: memref<1x32x16xf32, #tpu.memory_space<vmem>>, %arg2: memref<2x32x1xf32, #tpu.memory_space<vmem>>, %arg3: memref<2x32x1xf32, #tpu.memory_space<vmem>>, %arg4: memref<32x1xf32, #tpu.memory_space<vmem>>, %arg5: memref<32x1xf32, #tpu.memory_space<vmem>>, %arg6: memref<1x32x16xf32, #tpu.memory_space<vmem>>) attributes {dimension_semantics = [#tpu.dimension_semantics<parallel>], iteration_bounds = array<i64: 2>, scalar_prefetch = 0 : i64, scratch_operands = 0 : i64, tpu.core_type = #tpu.core_type<tc>, window_params = [{transform_indices = @transform_0, window_bounds = array<i64: 1, 32, 16>}, {pipeline_mode = #tpu.pipeline_mode<synchronous>, transform_indices = @transform_1, window_bounds = array<i64: 2, 32, 1>}, {pipeline_mode = #tpu.pipeline_mode<synchronous>, transform_indices = @transform_2, window_bounds = array<i64: 2, 32, 1>}, {pipeline_mode = #tpu.pipeline_mode<synchronous>, transform_indices = @transform_3, window_bounds = array<i64: 32, 1>}, {pipeline_mode = #tpu.pipeline_mode<synchronous>, transform_indices = @transform_4, window_bounds = array<i64: 32, 1>}, {transform_indices = @transform_5, window_bounds = array<i64: 1, 32, 16>}]} {
    %c0 = arith.constant 0 : index
    %c0_0 = arith.constant 0 : index
    %c0_1 = arith.constant 0 : index
    %0 = vector.load %arg2[%c0, %c0_0, %c0_1] : memref<2x32x1xf32, #tpu.memory_space<vmem>>, vector<2x32x1xf32>
    %cst = arith.constant dense<0.000000e+00> : vector<32x1xf32>
    %1 = vector.multi_reduction <add>, %0, %cst [0] : vector<2x32x1xf32> to vector<32x1xf32>
    %c0_2 = arith.constant 0 : index
    %c0_3 = arith.constant 0 : index
    %c0_4 = arith.constant 0 : index
    %2 = vector.load %arg3[%c0_2, %c0_3, %c0_4] : memref<2x32x1xf32, #tpu.memory_space<vmem>>, vector<2x32x1xf32>
    %cst_5 = arith.constant dense<0.000000e+00> : vector<32x1xf32>
    %3 = vector.multi_reduction <add>, %2, %cst_5 [0] : vector<2x32x1xf32> to vector<32x1xf32>
    %cst_6 = arith.constant 3.125000e-02 : f32
    %4 = vector.broadcast %cst_6 : f32 to vector<32x1xf32>
    %5 = arith.mulf %1, %4 : vector<32x1xf32>
    %cst_7 = arith.constant 3.125000e-02 : f32
    %6 = vector.broadcast %cst_7 : f32 to vector<32x1xf32>
    %7 = arith.mulf %3, %6 : vector<32x1xf32>
    %8 = arith.mulf %5, %5 : vector<32x1xf32>
    %9 = arith.subf %7, %8 : vector<32x1xf32>
    %cst_8 = arith.constant 0.000000e+00 : f32
    %10 = vector.broadcast %cst_8 : f32 to vector<32x1xf32>
    %11 = arith.maximumf %9, %10 : vector<32x1xf32>
    %c0_9 = arith.constant 0 : index
    %c0_10 = arith.constant 0 : index
    %12 = vector.load %arg4[%c0_9, %c0_10] : memref<32x1xf32, #tpu.memory_space<vmem>>, vector<32x1xf32>
    %cst_11 = arith.constant 9.99999974E-6 : f32
    %13 = vector.broadcast %cst_11 : f32 to vector<32x1xf32>
    %14 = arith.addf %11, %13 : vector<32x1xf32>
    %15 = math.rsqrt %14 : vector<32x1xf32>
    %16 = arith.mulf %12, %15 : vector<32x1xf32>
    %c0_12 = arith.constant 0 : index
    %c0_13 = arith.constant 0 : index
    %17 = vector.load %arg5[%c0_12, %c0_13] : memref<32x1xf32, #tpu.memory_space<vmem>>, vector<32x1xf32>
    %18 = arith.mulf %5, %16 : vector<32x1xf32>
    %19 = arith.subf %17, %18 : vector<32x1xf32>
    %c0_14 = arith.constant 0 : index
    %c0_15 = arith.constant 0 : index
    %c0_16 = arith.constant 0 : index
    %20 = vector.load %arg1[%c0_14, %c0_15, %c0_16] : memref<1x32x16xf32, #tpu.memory_space<vmem>>, vector<1x32x16xf32>
    %21 = vector.shape_cast %20 : vector<1x32x16xf32> to vector<32x16xf32>
    %22 = vector.broadcast %16 : vector<32x1xf32> to vector<32x16xf32>
    %23 = arith.mulf %21, %22 : vector<32x16xf32>
    %24 = vector.broadcast %19 : vector<32x1xf32> to vector<32x16xf32>
    %25 = arith.addf %23, %24 : vector<32x16xf32>
    %cst_17 = arith.constant 0.000000e+00 : f32
    %26 = vector.broadcast %cst_17 : f32 to vector<32x16xf32>
    %27 = arith.maximumf %25, %26 : vector<32x16xf32>
    %c0_18 = arith.constant 0 : index
    %c0_19 = arith.constant 0 : index
    %c0_20 = arith.constant 0 : index
    %28 = vector.load %arg6[%c0_18, %c0_19, %c0_20] : memref<1x32x16xf32, #tpu.memory_space<vmem>>, vector<1x32x16xf32>
    %29 = vector.shape_cast %28 : vector<1x32x16xf32> to vector<32x16xf32>
    %30 = vector.shape_cast %27 : vector<32x16xf32> to vector<1x32x16xf32>
    tpu.vector_store %arg6[%c0_18, %c0_19, %c0_20], %30 {strides = array<i32>} : memref<1x32x16xf32, #tpu.memory_space<vmem>>, vector<1x32x16xf32>,
    return
  }
  func.func @transform_0(%arg0: i32) -> (i32, i32, i32) {
    %c0_i32 = arith.constant 0 : i32
    %c0_i32_0 = arith.constant 0 : i32
    %c0_i32_1 = arith.constant 0 : i32
    return %arg0, %c0_i32, %c0_i32_0 : i32, i32, i32
  }
  func.func @transform_1(%arg0: i32) -> (i32, i32, i32) {
    %c0_i32 = arith.constant 0 : i32
    %c0_i32_0 = arith.constant 0 : i32
    %c0_i32_1 = arith.constant 0 : i32
    %c0_i32_2 = arith.constant 0 : i32
    return %c0_i32, %c0_i32_0, %c0_i32_1 : i32, i32, i32
  }
  func.func @transform_2(%arg0: i32) -> (i32, i32, i32) {
    %c0_i32 = arith.constant 0 : i32
    %c0_i32_0 = arith.constant 0 : i32
    %c0_i32_1 = arith.constant 0 : i32
    %c0_i32_2 = arith.constant 0 : i32
    return %c0_i32, %c0_i32_0, %c0_i32_1 : i32, i32, i32
  }
  func.func @transform_3(%arg0: i32) -> (i32, i32) {
    %c0_i32 = arith.constant 0 : i32
    %c0_i32_0 = arith.constant 0 : i32
    %c0_i32_1 = arith.constant 0 : i32
    return %c0_i32, %c0_i32_0 : i32, i32
  }
  func.func @transform_4(%arg0: i32) -> (i32, i32) {
    %c0_i32 = arith.constant 0 : i32
    %c0_i32_0 = arith.constant 0 : i32
    %c0_i32_1 = arith.constant 0 : i32
    return %c0_i32, %c0_i32_0 : i32, i32
  }
  func.func @transform_5(%arg0: i32) -> (i32, i32, i32) {
    %c0_i32 = arith.constant 0 : i32
    %c0_i32_0 = arith.constant 0 : i32
    %c0_i32_1 = arith.constant 0 : i32
    return %arg0, %c0_i32, %c0_i32_0 : i32, i32, i32
  }
}

module attributes {stable_mosaic.version = 11 : i64} {
  func.func @kernel(%arg0: i32, %arg1: memref<1x4x54xf32, #tpu.memory_space<vmem>>, %arg2: memref<32x160xf32, #tpu.memory_space<vmem>>, %arg3: memref<1x32x16xf32, #tpu.memory_space<vmem>>, %arg4: memref<1x32x1xf32, #tpu.memory_space<vmem>>, %arg5: memref<1x32x1xf32, #tpu.memory_space<vmem>>) attributes {dimension_semantics = [#tpu.dimension_semantics<parallel>], iteration_bounds = array<i64: 2>, scalar_prefetch = 0 : i64, scratch_operands = 0 : i64, tpu.core_type = #tpu.core_type<tc>, window_params = [{transform_indices = @transform_0, window_bounds = array<i64: 1, 4, 54>}, {pipeline_mode = #tpu.pipeline_mode<synchronous>, transform_indices = @transform_1, window_bounds = array<i64: 32, 160>}, {transform_indices = @transform_2, window_bounds = array<i64: 1, 32, 16>}, {transform_indices = @transform_3, window_bounds = array<i64: 1, 32, 1>}, {transform_indices = @transform_4, window_bounds = array<i64: 1, 32, 1>}]} {
    %c0 = arith.constant 0 : index
    %c0_0 = arith.constant 0 : index
    %c0_1 = arith.constant 0 : index
    %0 = vector.load %arg1[%c0, %c0_0, %c0_1] : memref<1x4x54xf32, #tpu.memory_space<vmem>>, vector<1x4x54xf32>
    %1 = vector.shape_cast %0 : vector<1x4x54xf32> to vector<4x54xf32>
    %2 = vector.extract_strided_slice %1 {offsets = [0, 19], sizes = [4, 16], strides = [1, 1]} : vector<4x54xf32> to vector<4x16xf32>
    %3 = vector.extract_strided_slice %1 {offsets = [0, 18], sizes = [4, 16], strides = [1, 1]} : vector<4x54xf32> to vector<4x16xf32>
    %4 = vector.extract_strided_slice %1 {offsets = [0, 20], sizes = [4, 16], strides = [1, 1]} : vector<4x54xf32> to vector<4x16xf32>
    %5 = tpu.iota {dimensions = array<i32: 1>} : vector<4x16xi32>
    %c1_i32 = arith.constant 1 : i32
    %6 = vector.broadcast %c1_i32 : i32 to vector<4x16xi32>
    %7 = arith.cmpi sge, %5, %6 : vector<4x16xi32>
    %cst = arith.constant 0xFF800000 : f32
    %8 = vector.broadcast %cst : f32 to vector<4x16xf32>
    %9 = arith.select %7, %3, %8 : vector<4x16xi1>, vector<4x16xf32>
    %c14_i32 = arith.constant 14 : i32
    %10 = vector.broadcast %c14_i32 : i32 to vector<4x16xi32>
    %11 = arith.cmpi sle, %5, %10 : vector<4x16xi32>
    %cst_2 = arith.constant 0xFF800000 : f32
    %12 = vector.broadcast %cst_2 : f32 to vector<4x16xf32>
    %13 = arith.select %11, %4, %12 : vector<4x16xi1>, vector<4x16xf32>
    %14 = arith.maximumf %9, %13 : vector<4x16xf32>
    %15 = arith.maximumf %2, %14 : vector<4x16xf32>
    %16 = vector.extract_strided_slice %1 {offsets = [0, 0], sizes = [4, 16], strides = [1, 1]} : vector<4x54xf32> to vector<4x16xf32>
    %17 = vector.extract_strided_slice %1 {offsets = [0, 1], sizes = [4, 16], strides = [1, 1]} : vector<4x54xf32> to vector<4x16xf32>
    %18 = vector.extract_strided_slice %1 {offsets = [0, 2], sizes = [4, 16], strides = [1, 1]} : vector<4x54xf32> to vector<4x16xf32>
    %19 = vector.extract_strided_slice %1 {offsets = [0, 3], sizes = [4, 16], strides = [1, 1]} : vector<4x54xf32> to vector<4x16xf32>
    %20 = vector.extract_strided_slice %1 {offsets = [0, 4], sizes = [4, 16], strides = [1, 1]} : vector<4x54xf32> to vector<4x16xf32>
    %21 = vector.extract_strided_slice %1 {offsets = [0, 5], sizes = [4, 16], strides = [1, 1]} : vector<4x54xf32> to vector<4x16xf32>
    %22 = vector.extract_strided_slice %1 {offsets = [0, 6], sizes = [4, 16], strides = [1, 1]} : vector<4x54xf32> to vector<4x16xf32>
    %23 = vector.extract_strided_slice %1 {offsets = [0, 7], sizes = [4, 16], strides = [1, 1]} : vector<4x54xf32> to vector<4x16xf32>
    %24 = vector.extract_strided_slice %1 {offsets = [0, 8], sizes = [4, 16], strides = [1, 1]} : vector<4x54xf32> to vector<4x16xf32>
    %25 = vector.extract_strided_slice %1 {offsets = [0, 9], sizes = [4, 16], strides = [1, 1]} : vector<4x54xf32> to vector<4x16xf32>
    %26 = vector.extract_strided_slice %1 {offsets = [0, 10], sizes = [4, 16], strides = [1, 1]} : vector<4x54xf32> to vector<4x16xf32>
    %27 = vector.extract_strided_slice %1 {offsets = [0, 11], sizes = [4, 16], strides = [1, 1]} : vector<4x54xf32> to vector<4x16xf32>
    %28 = vector.extract_strided_slice %1 {offsets = [0, 12], sizes = [4, 16], strides = [1, 1]} : vector<4x54xf32> to vector<4x16xf32>
    %29 = vector.extract_strided_slice %1 {offsets = [0, 13], sizes = [4, 16], strides = [1, 1]} : vector<4x54xf32> to vector<4x16xf32>
    %30 = vector.extract_strided_slice %1 {offsets = [0, 14], sizes = [4, 16], strides = [1, 1]} : vector<4x54xf32> to vector<4x16xf32>
    %31 = vector.extract_strided_slice %1 {offsets = [0, 15], sizes = [4, 16], strides = [1, 1]} : vector<4x54xf32> to vector<4x16xf32>
    %32 = vector.extract_strided_slice %1 {offsets = [0, 16], sizes = [4, 16], strides = [1, 1]} : vector<4x54xf32> to vector<4x16xf32>
    %33 = vector.extract_strided_slice %1 {offsets = [0, 17], sizes = [4, 16], strides = [1, 1]} : vector<4x54xf32> to vector<4x16xf32>
    %34 = vector.extract_strided_slice %1 {offsets = [0, 18], sizes = [4, 16], strides = [1, 1]} : vector<4x54xf32> to vector<4x16xf32>
    %35 = vector.extract_strided_slice %1 {offsets = [0, 19], sizes = [4, 16], strides = [1, 1]} : vector<4x54xf32> to vector<4x16xf32>
    %36 = vector.extract_strided_slice %1 {offsets = [0, 20], sizes = [4, 16], strides = [1, 1]} : vector<4x54xf32> to vector<4x16xf32>
    %37 = vector.extract_strided_slice %1 {offsets = [0, 21], sizes = [4, 16], strides = [1, 1]} : vector<4x54xf32> to vector<4x16xf32>
    %38 = vector.extract_strided_slice %1 {offsets = [0, 22], sizes = [4, 16], strides = [1, 1]} : vector<4x54xf32> to vector<4x16xf32>
    %39 = vector.extract_strided_slice %1 {offsets = [0, 23], sizes = [4, 16], strides = [1, 1]} : vector<4x54xf32> to vector<4x16xf32>
    %40 = vector.extract_strided_slice %1 {offsets = [0, 24], sizes = [4, 16], strides = [1, 1]} : vector<4x54xf32> to vector<4x16xf32>
    %41 = vector.extract_strided_slice %1 {offsets = [0, 25], sizes = [4, 16], strides = [1, 1]} : vector<4x54xf32> to vector<4x16xf32>
    %42 = vector.extract_strided_slice %1 {offsets = [0, 26], sizes = [4, 16], strides = [1, 1]} : vector<4x54xf32> to vector<4x16xf32>
    %43 = vector.extract_strided_slice %1 {offsets = [0, 27], sizes = [4, 16], strides = [1, 1]} : vector<4x54xf32> to vector<4x16xf32>
    %44 = vector.extract_strided_slice %1 {offsets = [0, 28], sizes = [4, 16], strides = [1, 1]} : vector<4x54xf32> to vector<4x16xf32>
    %45 = vector.extract_strided_slice %1 {offsets = [0, 29], sizes = [4, 16], strides = [1, 1]} : vector<4x54xf32> to vector<4x16xf32>
    %46 = vector.extract_strided_slice %1 {offsets = [0, 30], sizes = [4, 16], strides = [1, 1]} : vector<4x54xf32> to vector<4x16xf32>
    %47 = vector.extract_strided_slice %1 {offsets = [0, 31], sizes = [4, 16], strides = [1, 1]} : vector<4x54xf32> to vector<4x16xf32>
    %48 = vector.extract_strided_slice %1 {offsets = [0, 32], sizes = [4, 16], strides = [1, 1]} : vector<4x54xf32> to vector<4x16xf32>
    %49 = vector.extract_strided_slice %1 {offsets = [0, 33], sizes = [4, 16], strides = [1, 1]} : vector<4x54xf32> to vector<4x16xf32>
    %50 = vector.extract_strided_slice %1 {offsets = [0, 34], sizes = [4, 16], strides = [1, 1]} : vector<4x54xf32> to vector<4x16xf32>
    %51 = vector.extract_strided_slice %1 {offsets = [0, 35], sizes = [4, 16], strides = [1, 1]} : vector<4x54xf32> to vector<4x16xf32>
    %52 = vector.extract_strided_slice %1 {offsets = [0, 36], sizes = [4, 16], strides = [1, 1]} : vector<4x54xf32> to vector<4x16xf32>
    %53 = vector.extract_strided_slice %1 {offsets = [0, 37], sizes = [4, 16], strides = [1, 1]} : vector<4x54xf32> to vector<4x16xf32>
    %54 = vector.extract_strided_slice %1 {offsets = [0, 38], sizes = [4, 16], strides = [1, 1]} : vector<4x54xf32> to vector<4x16xf32>
    %55 = tpu.concatenate %16, %17, %18, %19, %20, %21, %22, %23, %24, %25, %26, %27, %28, %29, %30, %31 in 0 : vector<4x16xf32>, vector<4x16xf32>, vector<4x16xf32>, vector<4x16xf32>, vector<4x16xf32>, vector<4x16xf32>, vector<4x16xf32>, vector<4x16xf32>, vector<4x16xf32>, vector<4x16xf32>, vector<4x16xf32>, vector<4x16xf32>, vector<4x16xf32>, vector<4x16xf32>, vector<4x16xf32>, vector<4x16xf32> -> vector<64x16xf32>
    %56 = tpu.concatenate %32, %33, %34, %35, %36, %37, %38, %39, %40, %41, %42, %43, %44, %45, %46, %47 in 0 : vector<4x16xf32>, vector<4x16xf32>, vector<4x16xf32>, vector<4x16xf32>, vector<4x16xf32>, vector<4x16xf32>, vector<4x16xf32>, vector<4x16xf32>, vector<4x16xf32>, vector<4x16xf32>, vector<4x16xf32>, vector<4x16xf32>, vector<4x16xf32>, vector<4x16xf32>, vector<4x16xf32>, vector<4x16xf32> -> vector<64x16xf32>
    %57 = tpu.concatenate %48, %49, %50, %51, %52, %53, %54, %15 in 0 : vector<4x16xf32>, vector<4x16xf32>, vector<4x16xf32>, vector<4x16xf32>, vector<4x16xf32>, vector<4x16xf32>, vector<4x16xf32>, vector<4x16xf32> -> vector<32x16xf32>
    %58 = tpu.concatenate %55, %56, %57 in 0 : vector<64x16xf32>, vector<64x16xf32>, vector<32x16xf32> -> vector<160x16xf32>
    %c0_3 = arith.constant 0 : index
    %c0_4 = arith.constant 0 : index
    %59 = vector.load %arg2[%c0_3, %c0_4] : memref<32x160xf32, #tpu.memory_space<vmem>>, vector<32x160xf32>
    %cst_5 = arith.constant dense<0.000000e+00> : vector<32x16xf32>
    %60 = tpu.matmul %59, %58, %cst_5 {dimension_numbers = #tpu.dot_dimension_numbers<[1], [0], [0], [1], [0, 0, 1, 1], [], []>} : vector<32x160xf32>, vector<160x16xf32>, vector<32x16xf32> -> vector<32x16xf32>
    %c0_6 = arith.constant 0 : index
    %c0_7 = arith.constant 0 : index
    %c0_8 = arith.constant 0 : index
    %61 = vector.load %arg3[%c0_6, %c0_7, %c0_8] : memref<1x32x16xf32, #tpu.memory_space<vmem>>, vector<1x32x16xf32>
    %62 = vector.shape_cast %61 : vector<1x32x16xf32> to vector<32x16xf32>
    %63 = vector.shape_cast %60 : vector<32x16xf32> to vector<1x32x16xf32>
    tpu.vector_store %arg3[%c0_6, %c0_7, %c0_8], %63 {strides = array<i32>} : memref<1x32x16xf32, #tpu.memory_space<vmem>>, vector<1x32x16xf32>,
    %cst_9 = arith.constant dense<0.000000e+00> : vector<32xf32>
    %64 = vector.multi_reduction <add>, %60, %cst_9 [1] : vector<32x16xf32> to vector<32xf32>
    %65 = vector.shape_cast %64 : vector<32xf32> to vector<32x1xf32>
    %c0_10 = arith.constant 0 : index
    %c0_11 = arith.constant 0 : index
    %c0_12 = arith.constant 0 : index
    %66 = vector.load %arg4[%c0_10, %c0_11, %c0_12] : memref<1x32x1xf32, #tpu.memory_space<vmem>>, vector<1x32x1xf32>
    %67 = vector.shape_cast %66 : vector<1x32x1xf32> to vector<32x1xf32>
    %68 = vector.shape_cast %65 : vector<32x1xf32> to vector<1x32x1xf32>
    tpu.vector_store %arg4[%c0_10, %c0_11, %c0_12], %68 {strides = array<i32>} : memref<1x32x1xf32, #tpu.memory_space<vmem>>, vector<1x32x1xf32>,
    %69 = arith.mulf %60, %60 : vector<32x16xf32>
    %cst_13 = arith.constant dense<0.000000e+00> : vector<32xf32>
    %70 = vector.multi_reduction <add>, %69, %cst_13 [1] : vector<32x16xf32> to vector<32xf32>
    %71 = vector.shape_cast %70 : vector<32xf32> to vector<32x1xf32>
    %c0_14 = arith.constant 0 : index
    %c0_15 = arith.constant 0 : index
    %c0_16 = arith.constant 0 : index
    %72 = vector.load %arg5[%c0_14, %c0_15, %c0_16] : memref<1x32x1xf32, #tpu.memory_space<vmem>>, vector<1x32x1xf32>
    %73 = vector.shape_cast %72 : vector<1x32x1xf32> to vector<32x1xf32>
    %74 = vector.shape_cast %71 : vector<32x1xf32> to vector<1x32x1xf32>
    tpu.vector_store %arg5[%c0_14, %c0_15, %c0_16], %74 {strides = array<i32>} : memref<1x32x1xf32, #tpu.memory_space<vmem>>, vector<1x32x1xf32>,
    return
  }
  func.func @transform_0(%arg0: i32) -> (i32, i32, i32) {
    %c0_i32 = arith.constant 0 : i32
    %c0_i32_0 = arith.constant 0 : i32
    %c0_i32_1 = arith.constant 0 : i32
    return %arg0, %c0_i32, %c0_i32_0 : i32, i32, i32
  }
  func.func @transform_1(%arg0: i32) -> (i32, i32) {
    %c0_i32 = arith.constant 0 : i32
    %c0_i32_0 = arith.constant 0 : i32
    %c0_i32_1 = arith.constant 0 : i32
    return %c0_i32, %c0_i32_0 : i32, i32
  }
  func.func @transform_2(%arg0: i32) -> (i32, i32, i32) {
    %c0_i32 = arith.constant 0 : i32
    %c0_i32_0 = arith.constant 0 : i32
    %c0_i32_1 = arith.constant 0 : i32
    return %arg0, %c0_i32, %c0_i32_0 : i32, i32, i32
  }
  func.func @transform_3(%arg0: i32) -> (i32, i32, i32) {
    %c0_i32 = arith.constant 0 : i32
    %c0_i32_0 = arith.constant 0 : i32
    %c0_i32_1 = arith.constant 0 : i32
    return %arg0, %c0_i32, %c0_i32_0 : i32, i32, i32
  }
  func.func @transform_4(%arg0: i32) -> (i32, i32, i32) {
    %c0_i32 = arith.constant 0 : i32
    %c0_i32_0 = arith.constant 0 : i32
    %c0_i32_1 = arith.constant 0 : i32
    return %arg0, %c0_i32, %c0_i32_0 : i32, i32, i32
  }
}

</mosaic_0001>

<llo_original>
// kernel: inception_time_forward.3
$region0: #{inception_time_forward.3}
  #allocation0 [shape = 'u32[]', space=smem, size = 0x4, offset = 0x4, fixed_abs, tag = 'smem constant byte address 0x4 - core index']
  #allocation1 [shape = 'u32[72,128]{1,0:T(1,128)}', space=vmem, size = 0x9000, scoped, tag = 'internal scratch']
  %s0 = inlined_call_operand.vmem [shape: f32[2,32,16], index: 0, kind: input, shape index: {}, may-alias: {0,5}]
  %s1 = inlined_call_operand.vmem [shape: f32[2,32,1], index: 1, kind: input, shape index: {}]
  %s2 = inlined_call_operand.vmem [shape: f32[2,32,1], index: 2, kind: input, shape index: {}]
  %s3 = inlined_call_operand.vmem [shape: f32[32,1], index: 3, kind: input, shape index: {}]
  %s4 = inlined_call_operand.vmem [shape: f32[32,1], index: 4, kind: input, shape index: {}]
  %s5 = inlined_call_operand.vmem [shape: f32[2,32,16], index: 5, kind: output, shape index: {}, may-alias: {0,5}]
  %s6 = sld [smem:[#allocation0]]
  $region53: #{inception_time_forward.3} parent=0
    _
  %s8 = ssub.s32 1, %s6
  %s9 = scalar_select 0, %s8, %s6
  loop: start=0, step=1, limit=4
  $region2: #{inception_time_forward.3} parent=0 // loop_pre_header
    _
  $region3: #{inception_time_forward.3} parent=0 // loop_header
    %s11 = sphi 0, %s15
    %p12 = scmp.ge.s32.totalorder %s11, 4
    %s21 = sphi 0, %s23
    %s24 = sphi 0, %s21
    %s25 = sphi 0, %s24
    %s41 = sphi 0, %s25
    %s45 = sphi 0, %s45
    %s47 = sphi 0, %s45
    %s48 = sphi 0, %s47
    %s62 = sphi 0, %s48
    %s66 = sphi 0, %s66
    %s68 = sphi 0, %s66
    %s69 = sphi 0, %s68
    %s83 = sphi 0, %s69
    %s87 = sphi 0, %s87
    %s89 = sphi 0, %s87
    %s90 = sphi 0, %s89
    %s104 = sphi 0, %s90
    %s108 = sphi 0, %s108
    %s110 = sphi 0, %s108
    %s111 = sphi 0, %s110
    %s125 = sphi 0, %s111
    %s131 = sphi 0, %s133
    %s134 = sphi 0, %s131
    %s135 = sphi 0, %s134
    %s151 = sphi 0, %s135
  $region4: #{inception_time_forward.3} parent=0 // loop_header_branch
    %14 = sbr.rel (%p12) target = $region8
  $region5: #{inception_time_forward.3} parent=0 // loop_body
    %s16 = ssub.s32 %s11, 1
    %s17 = ssub.s32 %s11, 2
    %s18 = sadd.s32 %s11, 1
    %s19 = ssub.s32 %s11, %s18
    %p20 = scmp.eq.s32.totalorder %s19, 0
    %s22 = sadd.s32 %s21, 1
    %s23 = scalar_select %p20, %s21, %s22
    %p26 = pneg %p20
    %p27 = scmp.eq.s32.totalorder %s11, 1
    %p28 = por %p26, %p27
    %p29 = scmp.ne.s32.totalorder %s21, %s24
    %p30 = scmp.eq.s32.totalorder %s11, 0
    %p31 = por %p29, %p30
    %p32 = scmp.ne.s32.totalorder %s21, %s24
    %p33 = scmp.eq.s32.totalorder %s16, 1
    %p34 = por %p32, %p33
    %p35 = scmp.ne.s32.totalorder %s24, %s25
    %p36 = scmp.eq.s32.totalorder %s16, 0
    %p37 = por %p35, %p36
    %p38 = scmp.ne.s32.totalorder %s24, %s25
    %p39 = scmp.eq.s32.totalorder %s17, 1
    %p40 = por %p38, %p39
    %p42 = scmp.ne.s32.totalorder %s25, %s41
    %p43 = scmp.eq.s32.totalorder %s17, 0
    %p44 = por %p42, %p43
    %s46 = sadd.s32 %s45, 1
    %p49 = scmp.eq.s32.totalorder %s11, 1
    %p50 = scmp.ne.s32.totalorder %s45, %s47
    %p51 = scmp.eq.s32.totalorder %s11, 0
    %p52 = por %p50, %p51
    %p53 = scmp.ne.s32.totalorder %s45, %s47
    %p54 = scmp.eq.s32.totalorder %s16, 1
    %p55 = por %p53, %p54
    %p56 = scmp.ne.s32.totalorder %s47, %s48
    %p57 = scmp.eq.s32.totalorder %s16, 0
    %p58 = por %p56, %p57
    %p59 = scmp.ne.s32.totalorder %s47, %s48
    %p60 = scmp.eq.s32.totalorder %s17, 1
    %p61 = por %p59, %p60
    %p63 = scmp.ne.s32.totalorder %s48, %s62
    %p64 = scmp.eq.s32.totalorder %s17, 0
    %p65 = por %p63, %p64
    %s67 = sadd.s32 %s66, 1
    %p70 = scmp.eq.s32.totalorder %s11, 1
    %p71 = scmp.ne.s32.totalorder %s66, %s68
    %p72 = scmp.eq.s32.totalorder %s11, 0
    %p73 = por %p71, %p72
    %p74 = scmp.ne.s32.totalorder %s66, %s68
    %p75 = scmp.eq.s32.totalorder %s16, 1
    %p76 = por %p74, %p75
    %p77 = scmp.ne.s32.totalorder %s68, %s69
    %p78 = scmp.eq.s32.totalorder %s16, 0
    %p79 = por %p77, %p78
    %p80 = scmp.ne.s32.totalorder %s68, %s69
    %p81 = scmp.eq.s32.totalorder %s17, 1
    %p82 = por %p80, %p81
    %p84 = scmp.ne.s32.totalorder %s69, %s83
    %p85 = scmp.eq.s32.totalorder %s17, 0
    %p86 = por %p84, %p85
    %s88 = sadd.s32 %s87, 1
    %p91 = scmp.eq.s32.totalorder %s11, 1
    %p92 = scmp.ne.s32.totalorder %s87, %s89
    %p93 = scmp.eq.s32.totalorder %s11, 0
    %p94 = por %p92, %p93
    %p95 = scmp.ne.s32.totalorder %s87, %s89
    %p96 = scmp.eq.s32.totalorder %s16, 1
    %p97 = por %p95, %p96
    %p98 = scmp.ne.s32.totalorder %s89, %s90
    %p99 = scmp.eq.s32.totalorder %s16, 0
    %p100 = por %p98, %p99
    %p101 = scmp.ne.s32.totalorder %s89, %s90
    %p102 = scmp.eq.s32.totalorder %s17, 1
    %p103 = por %p101, %p102
    %p105 = scmp.ne.s32.totalorder %s90, %s104
    %p106 = scmp.eq.s32.totalorder %s17, 0
    %p107 = por %p105, %p106
    %s109 = sadd.s32 %s108, 1
    %p112 = scmp.eq.s32.totalorder %s11, 1
    %p113 = scmp.ne.s32.totalorder %s108, %s110
    %p114 = scmp.eq.s32.totalorder %s11, 0
    %p115 = por %p113, %p114
    %p116 = scmp.ne.s32.totalorder %s108, %s110
    %p117 = scmp.eq.s32.totalorder %s16, 1
    %p118 = por %p116, %p117
    %p119 = scmp.ne.s32.totalorder %s110, %s111
    %p120 = scmp.eq.s32.totalorder %s16, 0
    %p121 = por %p119, %p120
    %p122 = scmp.ne.s32.totalorder %s110, %s111
    %p123 = scmp.eq.s32.totalorder %s17, 1
    %p124 = por %p122, %p123
    %p126 = scmp.ne.s32.totalorder %s111, %s125
    %p127 = scmp.eq.s32.totalorder %s17, 0
    %p128 = por %p126, %p127
    %s129 = ssub.s32 %s11, %s18
    %p130 = scmp.eq.s32.totalorder %s129, 0
    %s132 = sadd.s32 %s131, 1
    %s133 = scalar_select %p130, %s131, %s132
    %p136 = pneg %p130
    %p137 = scmp.eq.s32.totalorder %s11, 1
    %p138 = por %p136, %p137
    %p139 = scmp.ne.s32.totalorder %s131, %s134
    %p140 = scmp.eq.s32.totalorder %s11, 0
    %p141 = por %p139, %p140
    %p142 = scmp.ne.s32.totalorder %s131, %s134
    %p143 = scmp.eq.s32.totalorder %s16, 1
    %p144 = por %p142, %p143
    %p145 = scmp.ne.s32.totalorder %s134, %s135
    %p146 = scmp.eq.s32.totalorder %s16, 0
    %p147 = por %p145, %p146
    %p148 = scmp.ne.s32.totalorder %s134, %s135
    %p149 = scmp.eq.s32.totalorder %s17, 1
    %p150 = por %p148, %p149
    %p152 = scmp.ne.s32.totalorder %s135, %s151
    %p153 = scmp.eq.s32.totalorder %s17, 0
    %p154 = por %p152, %p153
    %p155 = scmp.le.s32.totalorder 1, %s11
    %p156 = scmp.lt.s32.totalorder %s11, 3
    %p157 = pnand %p155, %p156
    %p158 = pneg %p157
    // Predicated region
    $region9: #{inception_time_forward.3} parent=5 // pred_check
      _
    $region10: #{inception_time_forward.3} parent=5 // pred_check_branch
      %160 = sbr.rel (%p157) target = $region12
    $region11: #{inception_time_forward.3} parent=5 // pred_region
      %s161 = ssub.s32 %s11, 1
      // Predicated region
      $region13: #{inception_time_forward.3} parent=11 // pred_check
        %p162 = pneg %p58
      $region14: #{inception_time_forward.3} parent=11 // pred_check_branch
        %164 = sbr.rel (%p162) target = $region16
      $region15: #{inception_time_forward.3} parent=11 // pred_region
        _
      $region16: #{inception_time_forward.3} parent=11 // pred_fallthru
        _
      // Predicated region
      $region17: #{inception_time_forward.3} parent=11 // pred_check
        %p165 = pneg %p79
      $region18: #{inception_time_forward.3} parent=11 // pred_check_branch
        %167 = sbr.rel (%p165) target = $region20
      $region19: #{inception_time_forward.3} parent=11 // pred_region
        _
      $region20: #{inception_time_forward.3} parent=11 // pred_fallthru
        _
      // Predicated region
      $region21: #{inception_time_forward.3} parent=11 // pred_check
        %p168 = pneg %p100
      $region22: #{inception_time_forward.3} parent=11 // pred_check_branch
        %170 = sbr.rel (%p168) target = $region24
      $region23: #{inception_time_forward.3} parent=11 // pred_region
        _
      $region24: #{inception_time_forward.3} parent=11 // pred_fallthru
        _
      // Predicated region
      $region25: #{inception_time_forward.3} parent=11 // pred_check
        %p171 = pneg %p121
      $region26: #{inception_time_forward.3} parent=11 // pred_check_branch
        %173 = sbr.rel (%p171) target = $region28
      $region27: #{inception_time_forward.3} parent=11 // pred_region
        _
      $region28: #{inception_time_forward.3} parent=11 // pred_fallthru
        _
    $region12: #{inception_time_forward.3} parent=5 // pred_fallthru
      _
    %p174 = scmp.lt.s32.totalorder %s11, 2
    // Predicated region
    $region29: #{inception_time_forward.3} parent=5 // pred_check
      %p175 = pneg %p174
    $region30: #{inception_time_forward.3} parent=5 // pred_check_branch
      %177 = sbr.rel (%p175) target = $region32
    $region31: #{inception_time_forward.3} parent=5 // pred_region
      // Predicated region
      $region33: #{inception_time_forward.3} parent=31 // pred_check
        %p178 = pneg %p31
      $region34: #{inception_time_forward.3} parent=31 // pred_check_branch
        %180 = sbr.rel (%p178) target = $region36
      $region35: #{inception_time_forward.3} parent=31 // pred_region
        %p181 = scmp.lt.s32.totalorder %s11, 1
        %s182 = scalar_select %p181, %s11, 1
        %s183 = smul.addr %s182, 4
        %s184 = smul.addr %s183, 8
        %s185 = scalar_lea.vmem %s0, %s184
      $region36: #{inception_time_forward.3} parent=31 // pred_fallthru
        _
    $region32: #{inception_time_forward.3} parent=5 // pred_fallthru
      _
    %p186 = scmp.le.s32.totalorder 1, %s11
    %p187 = scmp.lt.s32.totalorder %s11, 3
    %p188 = pnand %p186, %p187
    %p189 = pneg %p188
    // Predicated region
    $region37: #{inception_time_forward.3} parent=5 // pred_check
      _
    $region38: #{inception_time_forward.3} parent=5 // pred_check_branch
      %191 = sbr.rel (%p188) target = $region40
    $region39: #{inception_time_forward.3} parent=5 // pred_region
      %s192 = ssub.s32 %s11, 1
      %p193 = scmp.lt.s32.totalorder %s16, 1
      %s194 = scalar_select %p193, %s16, 1
      %s195 = smul.addr %s194, 4
      %s196 = smul.addr %s195, 8
      %s197 = scalar_lea.vmem %s0, %s196
      %p198 = pneg %p37
      %p199 = pneg %p34
      %p200 = pneg %p58
      %p201 = pneg %p55
      %p202 = pneg %p79
      %p203 = pneg %p76
      %p204 = pneg %p100
      %p205 = pneg %p97
      %p206 = pneg %p121
      %p207 = pneg %p118
      %p208 = pneg %p147
      %p209 = pneg %p144
      %p210 = scmp.lt.s32.totalorder %s16, 1
      %s211 = scalar_select %p210, %s16, 1
      %s212 = smul.addr %s211, 4
      %s213 = smul.addr %s212, 8
      %s214 = scalar_lea.vmem %s5, %s213
      %p215 = scmp.lt.s32.totalorder %s16, 1
      %s216 = scalar_select %p215, %s16, 1
      %s217 = smul.addr %s216, 4
      %s218 = smul.addr %s217, 8
      %s219 = scalar_lea.vmem %s0, %s218
      %p220 = scmp.lt.s32.totalorder %s16, 1
      %s221 = scalar_select %p220, %s16, 1
      %s222 = smul.addr %s221, 4
      %s223 = smul.addr %s222, 8
      %s224 = scalar_lea.vmem %s5, %s223
      %v225 = vld [vmem:[%s1] sm:$0xff]
      %v226 = vld [vmem:[%s1 + $0x8] sm:$0xff]
      %v227 = vld [vmem:[%s1 + $0x10] sm:$0xff]
      %v228 = vld [vmem:[%s1 + $0x18] sm:$0xff]
      %v229 = vld [vmem:[%s1 + $0x20] sm:$0xff]
      %v230 = vld [vmem:[%s1 + $0x28] sm:$0xff]
      %v231 = vld [vmem:[%s1 + $0x30] sm:$0xff]
      %v232 = vld [vmem:[%s1 + $0x38] sm:$0xff]
      %vm233 = vcmask 7168
      %v234 = vsel %vm233, %v225, 0.0
      %v235 = vsel %vm233, %v229, 0.0
      %v236 = vadd.f32 %v234, %v235
      %v237 = vsel %vm233, %v226, 0.0
      %v238 = vsel %vm233, %v230, 0.0
      %v239 = vadd.f32 %v237, %v238
      %v240 = vsel %vm233, %v227, 0.0
      %v241 = vsel %vm233, %v231, 0.0
      %v242 = vadd.f32 %v240, %v241
      %v243 = vsel %vm233, %v228, 0.0
      %v244 = vsel %vm233, %v232, 0.0
      %v245 = vadd.f32 %v243, %v244
      %v246 = vld [vmem:[%s2] sm:$0xff]
      %v247 = vld [vmem:[%s2 + $0x8] sm:$0xff]
      %v248 = vld [vmem:[%s2 + $0x10] sm:$0xff]
      %v249 = vld [vmem:[%s2 + $0x18] sm:$0xff]
      %v250 = vld [vmem:[%s2 + $0x20] sm:$0xff]
      %v251 = vld [vmem:[%s2 + $0x28] sm:$0xff]
      %v252 = vld [vmem:[%s2 + $0x30] sm:$0xff]
      %v253 = vld [vmem:[%s2 + $0x38] sm:$0xff]
      %v254 = vsel %vm233, %v246, 0.0
      %v255 = vsel %vm233, %v250, 0.0
      %v256 = vadd.f32 %v254, %v255
      %v257 = vsel %vm233, %v247, 0.0
      %v258 = vsel %vm233, %v251, 0.0
      %v259 = vadd.f32 %v257, %v258
      %v260 = vsel %vm233, %v248, 0.0
      %v261 = vsel %vm233, %v252, 0.0
      %v262 = vadd.f32 %v260, %v261
      %v263 = vsel %vm233, %v249, 0.0
      %v264 = vsel %vm233, %v253, 0.0
      %v265 = vadd.f32 %v263, %v264
      %v266 = vmul.f32 %v236, 0.03125
      %v267 = vmul.f32 %v239, 0.03125
      %v268 = vmul.f32 %v242, 0.03125
      %v269 = vmul.f32 %v245, 0.03125
      %v270 = vmul.f32 %v256, 0.03125
      %v271 = vmul.f32 %v259, 0.03125
      %v272 = vmul.f32 %v262, 0.03125
      %v273 = vmul.f32 %v265, 0.03125
      %v274 = vmul.f32 %v266, %v266
      %v275 = vmul.f32 %v267, %v267
      %v276 = vmul.f32 %v268, %v268
      %v277 = vmul.f32 %v269, %v269
      %v278 = vsub.f32 %v270, %v274
      %v279 = vsub.f32 %v271, %v275
      %v280 = vsub.f32 %v272, %v276
      %v281 = vsub.f32 %v273, %v277
      %v282 = vmax.f32 %v278, 0.0
      %v283 = vmax.f32 %v279, 0.0
      %v284 = vmax.f32 %v280, 0.0
      %v285 = vmax.f32 %v281, 0.0
      %v286 = vld [vmem:[%s3] sm:$0xff]
      %v287 = vld [vmem:[%s3 + $0x8] sm:$0xff]
      %v288 = vld [vmem:[%s3 + $0x10] sm:$0xff]
      %v289 = vld [vmem:[%s3 + $0x18] sm:$0xff]
      %v290 = vadd.f32 %v282, 1e-05
      %v291 = vadd.f32 %v283, 1e-05
      %v292 = vadd.f32 %v284, 1e-05
      %v293 = vadd.f32 %v285, 1e-05
      %v294 = vrsqrt.pop %v290
      %v295 = vmul.f32 %v294, %v290
      %v296 = vmul.f32 %v295, %v294
      %v297 = vmul.f32 0.5, %v296
      %v298 = vsub.f32 1.5, %v297
      %v299 = vmul.f32 %v294, %v298
      %vm300 = vweird.f32 %v290
      %vm301 = vweird.f32 %v294
      %vm302 = vmor %vm300, %vm301
      %v303 = vsel %vm302, %v294, %v299
      %v304 = vrsqrt.pop %v291
      %v305 = vmul.f32 %v304, %v291
      %v306 = vmul.f32 %v305, %v304
      %v307 = vmul.f32 0.5, %v306
      %v308 = vsub.f32 1.5, %v307
      %v309 = vmul.f32 %v304, %v308
      %vm310 = vweird.f32 %v291
      %vm311 = vweird.f32 %v304
      %vm312 = vmor %vm310, %vm311
      %v313 = vsel %vm312, %v304, %v309
      %v314 = vrsqrt.pop %v292
      %v315 = vmul.f32 %v314, %v292
      %v316 = vmul.f32 %v315, %v314
      %v317 = vmul.f32 0.5, %v316
      %v318 = vsub.f32 1.5, %v317
      %v319 = vmul.f32 %v314, %v318
      %vm320 = vweird.f32 %v292
      %vm321 = vweird.f32 %v314
      %vm322 = vmor %vm320, %vm321
      %v323 = vsel %vm322, %v314, %v319
      %v324 = vrsqrt.pop %v293
      %v325 = vmul.f32 %v324, %v293
      %v326 = vmul.f32 %v325, %v324
      %v327 = vmul.f32 0.5, %v326
      %v328 = vsub.f32 1.5, %v327
      %v329 = vmul.f32 %v324, %v328
      %vm330 = vweird.f32 %v293
      %vm331 = vweird.f32 %v324
      %vm332 = vmor %vm330, %vm331
      %v333 = vsel %vm332, %v324, %v329
      %v334 = vmul.f32 %v286, %v303
      %v335 = vmul.f32 %v287, %v313
      %v336 = vmul.f32 %v288, %v323
      %v337 = vmul.f32 %v289, %v333
      %v338 = vld [vmem:[%s4] sm:$0xff]
      %v339 = vld [vmem:[%s4 + $0x8] sm:$0xff]
      %v340 = vld [vmem:[%s4 + $0x10] sm:$0xff]
      %v341 = vld [vmem:[%s4 + $0x18] sm:$0xff]
      %v342 = vmul.f32 %v266, %v334
      %v343 = vmul.f32 %v267, %v335
      %v344 = vmul.f32 %v268, %v336
      %v345 = vmul.f32 %v269, %v337
      %v346 = vsub.f32 %v338, %v342
      %v347 = vsub.f32 %v339, %v343
      %v348 = vsub.f32 %v340, %v344
      %v349 = vsub.f32 %v341, %v345
      %v350 = vld [vmem:[%s219] sm:$0xff]
      %v351 = vld [vmem:[%s219 + $0x8] sm:$0xff]
      %v352 = vld [vmem:[%s219 + $0x10] sm:$0xff]
      %v353 = vld [vmem:[%s219 + $0x18] sm:$0xff]
      %355 = vset.pattern.permute.xlu0 0
      %356 = vperm.xlu0 %355, %v334
      %v357 = vpop.permute.xlu0 %356
      %360 = vset.pattern.permute.xlu0 0
      %361 = vperm.xlu0 %360, %v335
      %v362 = vpop.permute.xlu0 %361
      %365 = vset.pattern.permute.xlu0 0
      %366 = vperm.xlu0 %365, %v336
      %v367 = vpop.permute.xlu0 %366
      %370 = vset.pattern.permute.xlu0 0
      %371 = vperm.xlu0 %370, %v337
      %v372 = vpop.permute.xlu0 %371
      %v374 = vmul.f32 %v350, %v357
      %v375 = vmul.f32 %v351, %v362
      %v376 = vmul.f32 %v352, %v367
      %v377 = vmul.f32 %v353, %v372
      %379 = vset.pattern.permute.xlu0 0
      %380 = vperm.xlu0 %379, %v346
      %v381 = vpop.permute.xlu0 %380
      %384 = vset.pattern.permute.xlu0 0
      %385 = vperm.xlu0 %384, %v347
      %v386 = vpop.permute.xlu0 %385
      %389 = vset.pattern.permute.xlu0 0
      %390 = vperm.xlu0 %389, %v348
      %v391 = vpop.permute.xlu0 %390
      %394 = vset.pattern.permute.xlu0 0
      %395 = vperm.xlu0 %394, %v349
      %v396 = vpop.permute.xlu0 %395
      %v398 = vadd.f32 %v374, %v381
      %v399 = vadd.f32 %v375, %v386
      %v400 = vadd.f32 %v376, %v391
      %v401 = vadd.f32 %v377, %v396
      %v402 = vmax.f32 %v398, 0.0
      %v403 = vmax.f32 %v399, 0.0
      %v404 = vmax.f32 %v400, 0.0
      %v405 = vmax.f32 %v401, 0.0
      %vm406 = vcmask 130048
      %407 = vst.msk [vmem:[%s224] sm:$0xff] %vm406, %v402
      %408 = vst.msk [vmem:[%s224 + $0x8] sm:$0xff] %vm406, %v403
      %409 = vst.msk [vmem:[%s224 + $0x10] sm:$0xff] %vm406, %v404
      %410 = vst.msk [vmem:[%s224 + $0x18] sm:$0xff] %vm406, %v405
      %p411 = scmp.lt.s32.totalorder %s16, 1
      %s412 = scalar_select %p411, %s16, 1
      %s413 = smul.addr %s412, 4
      %s414 = smul.addr %s413, 8
      %s415 = scalar_lea.vmem %s5, %s414
      // Predicated region
      $region41: #{inception_time_forward.3} parent=39 // pred_check
        %p416 = pneg %p144
      $region42: #{inception_time_forward.3} parent=39 // pred_check_branch
        %418 = sbr.rel (%p416) target = $region44
      $region43: #{inception_time_forward.3} parent=39 // pred_region
        _
      $region44: #{inception_time_forward.3} parent=39 // pred_fallthru
        _
    $region40: #{inception_time_forward.3} parent=5 // pred_fallthru
      _
    %p419 = scmp.le.s32.totalorder 2, %s11
    // Predicated region
    $region45: #{inception_time_forward.3} parent=5 // pred_check
      %p420 = pneg %p419
    $region46: #{inception_time_forward.3} parent=5 // pred_check_branch
      %422 = sbr.rel (%p420) target = $region48
    $region47: #{inception_time_forward.3} parent=5 // pred_region
      %s423 = ssub.s32 %s11, 2
      // Predicated region
      $region49: #{inception_time_forward.3} parent=47 // pred_check
        %p424 = pneg %p150
      $region50: #{inception_time_forward.3} parent=47 // pred_check_branch
        %426 = sbr.rel (%p424) target = $region52
      $region51: #{inception_time_forward.3} parent=47 // pred_region
        %p427 = scmp.lt.s32.totalorder %s17, 1
        %s428 = scalar_select %p427, %s17, 1
        %s429 = smul.addr %s428, 4
        %s430 = smul.addr %s429, 8
        %s431 = scalar_lea.vmem %s5, %s430
      $region52: #{inception_time_forward.3} parent=47 // pred_fallthru
        _
    $region48: #{inception_time_forward.3} parent=5 // pred_fallthru
      _
  $region6: #{inception_time_forward.3} parent=0 // loop_footer
    %s15 = sadd.s32 1, %s11
  $region7: #{inception_time_forward.3} parent=0 // loop_footer_branch
    %10 = sbr.rel target = $region3
  $region8: #{inception_time_forward.3} parent=0 // loop_exit
    _

// kernel: inception_time_forward.2
$region0: #{inception_time_forward.2}
  #allocation0 [shape = 'u32[]', space=smem, size = 0x4, offset = 0x4, fixed_abs, tag = 'smem constant byte address 0x4 - core index']
  #allocation1 [shape = 'u32[72,128]{1,0:T(1,128)}', space=vmem, size = 0x9000, scoped, tag = 'internal scratch']
  %s0 = inlined_call_operand.vmem [shape: f32[2,4,54], index: 0, kind: input, shape index: {}]
  %s1 = inlined_call_operand.vmem [shape: f32[32,160], index: 1, kind: input, shape index: {}]
  %s2 = inlined_call_operand.vmem [shape: f32[2,32,16], index: 2, kind: output, shape index: {0}]
  %s3 = inlined_call_operand.vmem [shape: f32[2,32,1], index: 3, kind: output, shape index: {1}]
  %s4 = inlined_call_operand.vmem [shape: f32[2,32,1], index: 4, kind: output, shape index: {2}]
  %5 = xla_tuple %s2, %s3, %s4
  %s6 = sld [smem:[#allocation0]]
  $region57: #{inception_time_forward.2} parent=0
    _
  %s8 = ssub.s32 1, %s6
  %s9 = scalar_select 0, %s8, %s6
  loop: start=0, step=1, limit=4
  $region2: #{inception_time_forward.2} parent=0 // loop_pre_header
    _
  $region3: #{inception_time_forward.2} parent=0 // loop_header
    %s11 = sphi 0, %s15
    %p12 = scmp.ge.s32.totalorder %s11, 4
    %s21 = sphi 0, %s23
    %s24 = sphi 0, %s21
    %s25 = sphi 0, %s24
    %s41 = sphi 0, %s25
    %s45 = sphi 0, %s45
    %s47 = sphi 0, %s45
    %s48 = sphi 0, %s47
    %s62 = sphi 0, %s48
    %s68 = sphi 0, %s70
    %s71 = sphi 0, %s68
    %s72 = sphi 0, %s71
    %s88 = sphi 0, %s72
    %s94 = sphi 0, %s96
    %s97 = sphi 0, %s94
    %s98 = sphi 0, %s97
    %s114 = sphi 0, %s98
    %s120 = sphi 0, %s122
    %s123 = sphi 0, %s120
    %s124 = sphi 0, %s123
    %s140 = sphi 0, %s124
  $region4: #{inception_time_forward.2} parent=0 // loop_header_branch
    %14 = sbr.rel (%p12) target = $region8
  $region5: #{inception_time_forward.2} parent=0 // loop_body
    %s16 = ssub.s32 %s11, 1
    %s17 = ssub.s32 %s11, 2
    %s18 = sadd.s32 %s11, 1
    %s19 = ssub.s32 %s11, %s18
    %p20 = scmp.eq.s32.totalorder %s19, 0
    %s22 = sadd.s32 %s21, 1
    %s23 = scalar_select %p20, %s21, %s22
    %p26 = pneg %p20
    %p27 = scmp.eq.s32.totalorder %s11, 1
    %p28 = por %p26, %p27
    %p29 = scmp.ne.s32.totalorder %s21, %s24
    %p30 = scmp.eq.s32.totalorder %s11, 0
    %p31 = por %p29, %p30
    %p32 = scmp.ne.s32.totalorder %s21, %s24
    %p33 = scmp.eq.s32.totalorder %s16, 1
    %p34 = por %p32, %p33
    %p35 = scmp.ne.s32.totalorder %s24, %s25
    %p36 = scmp.eq.s32.totalorder %s16, 0
    %p37 = por %p35, %p36
    %p38 = scmp.ne.s32.totalorder %s24, %s25
    %p39 = scmp.eq.s32.totalorder %s17, 1
    %p40 = por %p38, %p39
    %p42 = scmp.ne.s32.totalorder %s25, %s41
    %p43 = scmp.eq.s32.totalorder %s17, 0
    %p44 = por %p42, %p43
    %s46 = sadd.s32 %s45, 1
    %p49 = scmp.eq.s32.totalorder %s11, 1
    %p50 = scmp.ne.s32.totalorder %s45, %s47
    %p51 = scmp.eq.s32.totalorder %s11, 0
    %p52 = por %p50, %p51
    %p53 = scmp.ne.s32.totalorder %s45, %s47
    %p54 = scmp.eq.s32.totalorder %s16, 1
    %p55 = por %p53, %p54
    %p56 = scmp.ne.s32.totalorder %s47, %s48
    %p57 = scmp.eq.s32.totalorder %s16, 0
    %p58 = por %p56, %p57
    %p59 = scmp.ne.s32.totalorder %s47, %s48
    %p60 = scmp.eq.s32.totalorder %s17, 1
    %p61 = por %p59, %p60
    %p63 = scmp.ne.s32.totalorder %s48, %s62
    %p64 = scmp.eq.s32.totalorder %s17, 0
    %p65 = por %p63, %p64
    %s66 = ssub.s32 %s11, %s18
    %p67 = scmp.eq.s32.totalorder %s66, 0
    %s69 = sadd.s32 %s68, 1
    %s70 = scalar_select %p67, %s68, %s69
    %p73 = pneg %p67
    %p74 = scmp.eq.s32.totalorder %s11, 1
    %p75 = por %p73, %p74
    %p76 = scmp.ne.s32.totalorder %s68, %s71
    %p77 = scmp.eq.s32.totalorder %s11, 0
    %p78 = por %p76, %p77
    %p79 = scmp.ne.s32.totalorder %s68, %s71
    %p80 = scmp.eq.s32.totalorder %s16, 1
    %p81 = por %p79, %p80
    %p82 = scmp.ne.s32.totalorder %s71, %s72
    %p83 = scmp.eq.s32.totalorder %s16, 0
    %p84 = por %p82, %p83
    %p85 = scmp.ne.s32.totalorder %s71, %s72
    %p86 = scmp.eq.s32.totalorder %s17, 1
    %p87 = por %p85, %p86
    %p89 = scmp.ne.s32.totalorder %s72, %s88
    %p90 = scmp.eq.s32.totalorder %s17, 0
    %p91 = por %p89, %p90
    %s92 = ssub.s32 %s11, %s18
    %p93 = scmp.eq.s32.totalorder %s92, 0
    %s95 = sadd.s32 %s94, 1
    %s96 = scalar_select %p93, %s94, %s95
    %p99 = pneg %p93
    %p100 = scmp.eq.s32.totalorder %s11, 1
    %p101 = por %p99, %p100
    %p102 = scmp.ne.s32.totalorder %s94, %s97
    %p103 = scmp.eq.s32.totalorder %s11, 0
    %p104 = por %p102, %p103
    %p105 = scmp.ne.s32.totalorder %s94, %s97
    %p106 = scmp.eq.s32.totalorder %s16, 1
    %p107 = por %p105, %p106
    %p108 = scmp.ne.s32.totalorder %s97, %s98
    %p109 = scmp.eq.s32.totalorder %s16, 0
    %p110 = por %p108, %p109
    %p111 = scmp.ne.s32.totalorder %s97, %s98
    %p112 = scmp.eq.s32.totalorder %s17, 1
    %p113 = por %p111, %p112
    %p115 = scmp.ne.s32.totalorder %s98, %s114
    %p116 = scmp.eq.s32.totalorder %s17, 0
    %p117 = por %p115, %p116
    %s118 = ssub.s32 %s11, %s18
    %p119 = scmp.eq.s32.totalorder %s118, 0
    %s121 = sadd.s32 %s120, 1
    %s122 = scalar_select %p119, %s120, %s121
    %p125 = pneg %p119
    %p126 = scmp.eq.s32.totalorder %s11, 1
    %p127 = por %p125, %p126
    %p128 = scmp.ne.s32.totalorder %s120, %s123
    %p129 = scmp.eq.s32.totalorder %s11, 0
    %p130 = por %p128, %p129
    %p131 = scmp.ne.s32.totalorder %s120, %s123
    %p132 = scmp.eq.s32.totalorder %s16, 1
    %p133 = por %p131, %p132
    %p134 = scmp.ne.s32.totalorder %s123, %s124
    %p135 = scmp.eq.s32.totalorder %s16, 0
    %p136 = por %p134, %p135
    %p137 = scmp.ne.s32.totalorder %s123, %s124
    %p138 = scmp.eq.s32.totalorder %s17, 1
    %p139 = por %p137, %p138
    %p141 = scmp.ne.s32.totalorder %s124, %s140
    %p142 = scmp.eq.s32.totalorder %s17, 0
    %p143 = por %p141, %p142
    %p144 = scmp.le.s32.totalorder 1, %s11
    %p145 = scmp.lt.s32.totalorder %s11, 3
    %p146 = pnand %p144, %p145
    %p147 = pneg %p146
    // Predicated region
    $region9: #{inception_time_forward.2} parent=5 // pred_check
      _
    $region10: #{inception_time_forward.2} parent=5 // pred_check_branch
      %149 = sbr.rel (%p146) target = $region12
    $region11: #{inception_time_forward.2} parent=5 // pred_region
      %s150 = ssub.s32 %s11, 1
      // Predicated region
      $region13: #{inception_time_forward.2} parent=11 // pred_check
        %p151 = pneg %p58
      $region14: #{inception_time_forward.2} parent=11 // pred_check_branch
        %153 = sbr.rel (%p151) target = $region16
      $region15: #{inception_time_forward.2} parent=11 // pred_region
        _
      $region16: #{inception_time_forward.2} parent=11 // pred_fallthru
        _
    $region12: #{inception_time_forward.2} parent=5 // pred_fallthru
      _
    %p154 = scmp.lt.s32.totalorder %s11, 2
    // Predicated region
    $region17: #{inception_time_forward.2} parent=5 // pred_check
      %p155 = pneg %p154
    $region18: #{inception_time_forward.2} parent=5 // pred_check_branch
      %157 = sbr.rel (%p155) target = $region20
    $region19: #{inception_time_forward.2} parent=5 // pred_region
      // Predicated region
      $region21: #{inception_time_forward.2} parent=19 // pred_check
        %p158 = pneg %p31
      $region22: #{inception_time_forward.2} parent=19 // pred_check_branch
        %160 = sbr.rel (%p158) target = $region24
      $region23: #{inception_time_forward.2} parent=19 // pred_region
        %p161 = scmp.lt.s32.totalorder %s11, 1
        %s162 = scalar_select %p161, %s11, 1
        %s163 = smul.addr %s162, 4
        %s164 = scalar_lea.vmem %s0, %s163
      $region24: #{inception_time_forward.2} parent=19 // pred_fallthru
        _
    $region20: #{inception_time_forward.2} parent=5 // pred_fallthru
      _
    %p165 = scmp.le.s32.totalorder 1, %s11
    %p166 = scmp.lt.s32.totalorder %s11, 3
    %p167 = pnand %p165, %p166
    %p168 = pneg %p167
    // Predicated region
    $region25: #{inception_time_forward.2} parent=5 // pred_check
      _
    $region26: #{inception_time_forward.2} parent=5 // pred_check_branch
      %170 = sbr.rel (%p167) target = $region28
    $region27: #{inception_time_forward.2} parent=5 // pred_region
      %s171 = ssub.s32 %s11, 1
      %p172 = scmp.lt.s32.totalorder %s16, 1
      %s173 = scalar_select %p172, %s16, 1
      %s174 = smul.addr %s173, 4
      %s175 = scalar_lea.vmem %s0, %s174
      %p176 = pneg %p37
      %p177 = pneg %p34
      %p178 = pneg %p58
      %p179 = pneg %p55
      %p180 = pneg %p84
      %p181 = pneg %p81
      %p182 = scmp.lt.s32.totalorder %s16, 1
      %s183 = scalar_select %p182, %s16, 1
      %s184 = smul.addr %s183, 4
      %s185 = smul.addr %s184, 8
      %s186 = scalar_lea.vmem %s2, %s185
      %p187 = pneg %p110
      %p188 = pneg %p107
      %p189 = scmp.lt.s32.totalorder %s16, 1
      %s190 = scalar_select %p189, %s16, 1
      %s191 = smul.addr %s190, 4
      %s192 = smul.addr %s191, 8
      %s193 = scalar_lea.vmem %s3, %s192
      %p194 = pneg %p136
      %p195 = pneg %p133
      %p196 = scmp.lt.s32.totalorder %s16, 1
      %s197 = scalar_select %p196, %s16, 1
      %s198 = smul.addr %s197, 4
      %s199 = smul.addr %s198, 8
      %s200 = scalar_lea.vmem %s4, %s199
      %p201 = scmp.lt.s32.totalorder %s16, 1
      %s202 = scalar_select %p201, %s16, 1
      %s203 = smul.addr %s202, 4
      %s204 = scalar_lea.vmem %s0, %s203
      %p205 = scmp.lt.s32.totalorder %s16, 1
      %s206 = scalar_select %p205, %s16, 1
      %s207 = smul.addr %s206, 4
      %s208 = smul.addr %s207, 8
      %s209 = scalar_lea.vmem %s2, %s208
      %p210 = scmp.lt.s32.totalorder %s16, 1
      %s211 = scalar_select %p210, %s16, 1
      %s212 = smul.addr %s211, 4
      %s213 = smul.addr %s212, 8
      %s214 = scalar_lea.vmem %s3, %s213
      %p215 = scmp.lt.s32.totalorder %s16, 1
      %s216 = scalar_select %p215, %s16, 1
      %s217 = smul.addr %s216, 4
      %s218 = smul.addr %s217, 8
      %s219 = scalar_lea.vmem %s4, %s218
      %v220 = vld [vmem:[%s204] sm:$0xf]
      %v221 = vlaneseq
      %v222 = vand.u32 %v221, 127
      %vm223 = vcmp.ge.s32.totalorder %v222, 1
      %225 = vrot.lane.b32.xlu0 %v220, 110
      %v226 = vpop.permute.xlu0 %225
      %v228 = vsel %vm223, %v226, -inf
      %vm229 = vcmp.le.s32.totalorder %v222, 14
      %230 = vrot.lane.b32.xlu0 %v220, 108
      %v231 = vpop.permute.xlu0 %230
      %v233 = vsel %vm229, %v231, -inf
      %v234 = vmax.f32 %v228, %v233
      %236 = vrot.lane.b32.xlu0 %v234, 19
      %v237 = vpop.permute.xlu0 %236
      %v239 = vmax.f32 %v220, %v237
      %v240 = vrot.slane %v220, 4
      %241 = vrot.lane.b32.xlu0 %v240, 127
      %v242 = vpop.permute.xlu0 %241
      %244 = vrot.lane.b32.xlu0 %v220, 126
      %v245 = vpop.permute.xlu0 %244
      %247 = vrot.lane.b32.xlu0 %v240, 125
      %v248 = vpop.permute.xlu0 %247
      %250 = vrot.lane.b32.xlu0 %v220, 124
      %v251 = vpop.permute.xlu0 %250
      %253 = vrot.lane.b32.xlu0 %v240, 123
      %v254 = vpop.permute.xlu0 %253
      %256 = vrot.lane.b32.xlu0 %v220, 122
      %v257 = vpop.permute.xlu0 %256
      %259 = vrot.lane.b32.xlu0 %v240, 121
      %v260 = vpop.permute.xlu0 %259
      %262 = vrot.lane.b32.xlu0 %v220, 120
      %v263 = vpop.permute.xlu0 %262
      %265 = vrot.lane.b32.xlu0 %v240, 119
      %v266 = vpop.permute.xlu0 %265
      %268 = vrot.lane.b32.xlu0 %v220, 118
      %v269 = vpop.permute.xlu0 %268
      %271 = vrot.lane.b32.xlu0 %v240, 117
      %v272 = vpop.permute.xlu0 %271
      %274 = vrot.lane.b32.xlu0 %v220, 116
      %v275 = vpop.permute.xlu0 %274
      %277 = vrot.lane.b32.xlu0 %v240, 115
      %v278 = vpop.permute.xlu0 %277
      %280 = vrot.lane.b32.xlu0 %v220, 114
      %v281 = vpop.permute.xlu0 %280
      %283 = vrot.lane.b32.xlu0 %v240, 113
      %v284 = vpop.permute.xlu0 %283
      %vm286 = vcmask 1043456
      %v287 = vsel %vm286, %v220, %v242
      %v288 = vsel %vm286, %v245, %v248
      %v289 = vsel %vm286, %v251, %v254
      %v290 = vsel %vm286, %v257, %v260
      %v291 = vsel %vm286, %v263, %v266
      %v292 = vsel %vm286, %v269, %v272
      %v293 = vsel %vm286, %v275, %v278
      %v294 = vsel %vm286, %v281, %v284
      %v296 = vrot.slane %v239, 4
      %297 = vrot.lane.b32.xlu0 %v296, 13
      %v298 = vpop.permute.xlu0 %297
      %v300 = vsel %vm286, %v257, %v298
      %309 = vrot.lane.b32.xlu0 %v287, 112
      %v310 = vpop.permute.xlu0 %309
      %311 = vrot.lane.b32.xlu0 %v288, 112
      %v312 = vpop.permute.xlu0 %311
      %313 = vrot.lane.b32.xlu0 %v289, 112
      %v314 = vpop.permute.xlu0 %313
      %315 = vrot.lane.b32.xlu0 %v290, 112
      %v316 = vpop.permute.xlu0 %315
      %317 = vrot.lane.b32.xlu0 %v291, 112
      %v318 = vpop.permute.xlu0 %317
      %319 = vrot.lane.b32.xlu0 %v292, 112
      %v320 = vpop.permute.xlu0 %319
      %321 = vrot.lane.b32.xlu0 %v293, 112
      %v322 = vpop.permute.xlu0 %321
      %323 = vrot.lane.b32.xlu0 %v294, 112
      %v324 = vpop.permute.xlu0 %323
      %334 = vrot.lane.b32.xlu0 %v287, 96
      %v335 = vpop.permute.xlu0 %334
      %336 = vrot.lane.b32.xlu0 %v288, 96
      %v337 = vpop.permute.xlu0 %336
      %338 = vrot.lane.b32.xlu0 %v289, 96
      %v339 = vpop.permute.xlu0 %338
      %340 = vrot.lane.b32.xlu0 %v300, 96
      %v341 = vpop.permute.xlu0 %340
      %v346 = vld [vmem:[%s1] sm:$0xff]
      %v347 = vld [vmem:[%s1 + $0x8] sm:$0xff]
      %v348 = vld [vmem:[%s1 + $0x10] sm:$0xff]
      %v349 = vld [vmem:[%s1 + $0x18] sm:$0xff]
      %v350 = vld [vmem:[%s1 + $0x20] sm:$0xff]
      %v351 = vld [vmem:[%s1 + $0x28] sm:$0xff]
      %v352 = vld [vmem:[%s1 + $0x30] sm:$0xff]
      %v353 = vld [vmem:[%s1 + $0x38] sm:$0xff]
      %vm354 = vcmask 261120
      %v356 = vsel %vm354, %v347, 0
      %v359 = vsel %vm354, %v349, 0
      %v362 = vsel %vm354, %v351, 0
      %v365 = vsel %vm354, %v353, 0
      %367 = vmatpush.msra.mxu0 %v324
      %368 = vmatpush.msra.mxu0 %v322
      %369 = vmatpush.msra.mxu0 %v320
      %370 = vmatpush.msra.mxu0 %v318
      %371 = vmatpush.msra.mxu0 %v316
      %372 = vmatpush.msra.mxu0 %v314
      %373 = vmatpush.msra.mxu0 %v312
      %374 = vmatpush.msra.mxu0 %v310
      %375 = vmatpush.msra.mxu0 %v294
      %376 = vmatpush.msra.mxu0 %v293
      %377 = vmatpush.msra.mxu0 %v292
      %378 = vmatpush.msra.mxu0 %v291
      %379 = vmatpush.msra.mxu0 %v290
      %380 = vmatpush.msra.mxu0 %v289
      %381 = vmatpush.msra.mxu0 %v288
      %382 = vmatpush.msra.mxu0 %v287
      %383 = vmatmul.f32.gmra.mxu0 %v346
      %v384 = vpop.f32.mrf.mxu0
      %v385 = vadd.f32 0.0, %v384
      %386 = vmatmul.f32.gmra.mxu0 %v348
      %v387 = vpop.f32.mrf.mxu0
      %v388 = vadd.f32 0.0, %v387
      %389 = vmatmul.f32.gmra.mxu0 %v350
      %v390 = vpop.f32.mrf.mxu0
      %v391 = vadd.f32 0.0, %v390
      %392 = vmatmul.f32.gmra.mxu0 %v352
      %v393 = vpop.f32.mrf.mxu0
      %v394 = vadd.f32 0.0, %v393
      %395 = vdwg.mxu0
      %396 = vmatpush.msra.mxu0 0.0
      %397 = vmatpush.msra.mxu0 0.0
      %398 = vmatpush.msra.mxu0 0.0
      %399 = vmatpush.msra.mxu0 0.0
      %400 = vmatpush.msra.mxu0 0.0
      %401 = vmatpush.msra.mxu0 0.0
      %402 = vmatpush.msra.mxu0 0.0
      %403 = vmatpush.msra.mxu0 0.0
      %404 = vmatpush.msra.mxu0 0.0
      %405 = vmatpush.msra.mxu0 0.0
      %406 = vmatpush.msra.mxu0 0.0
      %407 = vmatpush.msra.mxu0 0.0
      %408 = vmatpush.msra.mxu0 %v341
      %409 = vmatpush.msra.mxu0 %v339
      %410 = vmatpush.msra.mxu0 %v337
      %411 = vmatpush.msra.mxu0 %v335
      %412 = vmatmul.f32.gmra.mxu0 %v356
      %v413 = vpop.f32.mrf.mxu0
      %v414 = vadd.f32 %v385, %v413
      %415 = vmatmul.f32.gmra.mxu0 %v359
      %v416 = vpop.f32.mrf.mxu0
      %v417 = vadd.f32 %v388, %v416
      %418 = vmatmul.f32.gmra.mxu0 %v362
      %v419 = vpop.f32.mrf.mxu0
      %v420 = vadd.f32 %v391, %v419
      %421 = vmatmul.f32.gmra.mxu0 %v365
      %v422 = vpop.f32.mrf.mxu0
      %v423 = vadd.f32 %v394, %v422
      %424 = vdwg.mxu0
      %vm425 = vcmask 130048
      %426 = vst.msk [vmem:[%s209] sm:$0xff] %vm425, %v414
      %427 = vst.msk [vmem:[%s209 + $0x8] sm:$0xff] %vm425, %v417
      %428 = vst.msk [vmem:[%s209 + $0x10] sm:$0xff] %vm425, %v420
      %429 = vst.msk [vmem:[%s209 + $0x18] sm:$0xff] %vm425, %v423
      %v430 = vsel %vm425, %v414, 0.0
      %431 = vadd.xlane.f32.xlu0 %v430
      %v432 = vpop.xlane.xlu0 %431
      %v433 = vsel %vm425, %v417, 0.0
      %434 = vadd.xlane.f32.xlu0 %v433
      %v435 = vpop.xlane.xlu0 %434
      %v436 = vsel %vm425, %v420, 0.0
      %437 = vadd.xlane.f32.xlu0 %v436
      %v438 = vpop.xlane.xlu0 %437
      %v439 = vsel %vm425, %v423, 0.0
      %440 = vadd.xlane.f32.xlu0 %v439
      %v441 = vpop.xlane.xlu0 %440
      %vm442 = vcmask 7168
      %443 = vst.msk [vmem:[%s214] sm:$0xff] %vm442, %v432
      %444 = vst.msk [vmem:[%s214 + $0x8] sm:$0xff] %vm442, %v435
      %445 = vst.msk [vmem:[%s214 + $0x10] sm:$0xff] %vm442, %v438
      %446 = vst.msk [vmem:[%s214 + $0x18] sm:$0xff] %vm442, %v441
      %v447 = vmul.f32 %v414, %v414
      %v448 = vmul.f32 %v417, %v417
      %v449 = vmul.f32 %v420, %v420
      %v450 = vmul.f32 %v423, %v423
      %v451 = vsel %vm425, %v447, 0.0
      %452 = vadd.xlane.f32.xlu0 %v451
      %v453 = vpop.xlane.xlu0 %452
      %v454 = vsel %vm425, %v448, 0.0
      %455 = vadd.xlane.f32.xlu0 %v454
      %v456 = vpop.xlane.xlu0 %455
      %v457 = vsel %vm425, %v449, 0.0
      %458 = vadd.xlane.f32.xlu0 %v457
      %v459 = vpop.xlane.xlu0 %458
      %v460 = vsel %vm425, %v450, 0.0
      %461 = vadd.xlane.f32.xlu0 %v460
      %v462 = vpop.xlane.xlu0 %461
      %463 = vst.msk [vmem:[%s219] sm:$0xff] %vm442, %v453
      %464 = vst.msk [vmem:[%s219 + $0x8] sm:$0xff] %vm442, %v456
      %465 = vst.msk [vmem:[%s219 + $0x10] sm:$0xff] %vm442, %v459
      %466 = vst.msk [vmem:[%s219 + $0x18] sm:$0xff] %vm442, %v462
      %p467 = scmp.lt.s32.totalorder %s16, 1
      %s468 = scalar_select %p467, %s16, 1
      %s469 = smul.addr %s468, 4
      %s470 = smul.addr %s469, 8
      %s471 = scalar_lea.vmem %s2, %s470
      %p472 = scmp.lt.s32.totalorder %s16, 1
      %s473 = scalar_select %p472, %s16, 1
      %s474 = smul.addr %s473, 4
      %s475 = smul.addr %s474, 8
      %s476 = scalar_lea.vmem %s3, %s475
      %p477 = scmp.lt.s32.totalorder %s16, 1
      %s478 = scalar_select %p477, %s16, 1
      %s479 = smul.addr %s478, 4
      %s480 = smul.addr %s479, 8
      %s481 = scalar_lea.vmem %s4, %s480
      // Predicated region
      $region29: #{inception_time_forward.2} parent=27 // pred_check
        %p482 = pneg %p81
      $region30: #{inception_time_forward.2} parent=27 // pred_check_branch
        %484 = sbr.rel (%p482) target = $region32
      $region31: #{inception_time_forward.2} parent=27 // pred_region
        _
      $region32: #{inception_time_forward.2} parent=27 // pred_fallthru
        _
      // Predicated region
      $region33: #{inception_time_forward.2} parent=27 // pred_check
        %p485 = pneg %p107
      $region34: #{inception_time_forward.2} parent=27 // pred_check_branch
        %487 = sbr.rel (%p485) target = $region36
      $region35: #{inception_time_forward.2} parent=27 // pred_region
        _
      $region36: #{inception_time_forward.2} parent=27 // pred_fallthru
        _
      // Predicated region
      $region37: #{inception_time_forward.2} parent=27 // pred_check
        %p488 = pneg %p133
      $region38: #{inception_time_forward.2} parent=27 // pred_check_branch
        %490 = sbr.rel (%p488) target = $region40
      $region39: #{inception_time_forward.2} parent=27 // pred_region
        _
      $region40: #{inception_time_forward.2} parent=27 // pred_fallthru
        _
    $region28: #{inception_time_forward.2} parent=5 // pred_fallthru
      _
    %p491 = scmp.le.s32.totalorder 2, %s11
    // Predicated region
    $region41: #{inception_time_forward.2} parent=5 // pred_check
      %p492 = pneg %p491
    $region42: #{inception_time_forward.2} parent=5 // pred_check_branch
      %494 = sbr.rel (%p492) target = $region44
    $region43: #{inception_time_forward.2} parent=5 // pred_region
      %s495 = ssub.s32 %s11, 2
      // Predicated region
      $region45: #{inception_time_forward.2} parent=43 // pred_check
        %p496 = pneg %p87
      $region46: #{inception_time_forward.2} parent=43 // pred_check_branch
        %498 = sbr.rel (%p496) target = $region48
      $region47: #{inception_time_forward.2} parent=43 // pred_region
        %p499 = scmp.lt.s32.totalorder %s17, 1
        %s500 = scalar_select %p499, %s17, 1
        %s501 = smul.addr %s500, 4
        %s502 = smul.addr %s501, 8
        %s503 = scalar_lea.vmem %s2, %s502
      $region48: #{inception_time_forward.2} parent=43 // pred_fallthru
        _
      // Predicated region
      $region49: #{inception_time_forward.2} parent=43 // pred_check
        %p504 = pneg %p113
      $region50: #{inception_time_forward.2} parent=43 // pred_check_branch
        %506 = sbr.rel (%p504) target = $region52
      $region51: #{inception_time_forward.2} parent=43 // pred_region
        %p507 = scmp.lt.s32.totalorder %s17, 1
        %s508 = scalar_select %p507, %s17, 1
        %s509 = smul.addr %s508, 4
        %s510 = smul.addr %s509, 8
        %s511 = scalar_lea.vmem %s3, %s510
      $region52: #{inception_time_forward.2} parent=43 // pred_fallthru
        _
      // Predicated region
      $region53: #{inception_time_forward.2} parent=43 // pred_check
        %p512 = pneg %p139
      $region54: #{inception_time_forward.2} parent=43 // pred_check_branch
        %514 = sbr.rel (%p512) target = $region56
      $region55: #{inception_time_forward.2} parent=43 // pred_region
        %p515 = scmp.lt.s32.totalorder %s17, 1
        %s516 = scalar_select %p515, %s17, 1
        %s517 = smul.addr %s516, 4
        %s518 = smul.addr %s517, 8
        %s519 = scalar_lea.vmem %s4, %s518
      $region56: #{inception_time_forward.2} parent=43 // pred_fallthru
        _
    $region44: #{inception_time_forward.2} parent=5 // pred_fallthru
      _
  $region6: #{inception_time_forward.2} parent=0 // loop_footer
    %s15 = sadd.s32 1, %s11
  $region7: #{inception_time_forward.2} parent=0 // loop_footer_branch
    %10 = sbr.rel target = $region3
  $region8: #{inception_time_forward.2} parent=0 // loop_exit
    _

</llo_original>
